<compile_context>
chip_gen: v7x
topology: tpu7x:2x2x1
jax: 0.10.0
libtpu: 0.0.40
codegen_flags: <defaults>
</compile_context>

<pallas_src>
import jax
import jax.numpy as jnp
from jax.experimental import pallas as pl
from jax.experimental.pallas import tpu as pltpu


# ----------------------------- Pallas kernel --------------------------------


def _msagen_kernel(tok_ref, mask_ref, tab_ref, noise_ref, mut_ref):
    # tok_ref   : (1, TM)   int32 MSA token ids (rows on the lane axis)
    # mask_ref  : (1, TM)   f32, 1.0 where padded, 0.0 where valid
    # tab_ref   : (2V, V)   bf16, transposed fully-folded logits table
    #                       (gelu(emb @ w1 + b1) @ [wn|wm] + [bn|bm]).T
    # noise_ref : (V, TM)   f32 noise logits   (feature-major / lane-dense)
    # mut_ref   : (V, TM)   f32 mutation logits
    v = noise_ref.shape[0]
    tm = tok_ref.shape[1]

    tok = tok_ref[...]                                           # (1, TM) i32
    vocab = jax.lax.broadcasted_iota(jnp.int32, (v, tm), 0)      # (V, TM)
    onehot = (vocab == tok).astype(jnp.bfloat16)                 # exact 0/1 selector

    # Embedding gather + both heads in one MXU pass: the one-hot column selects
    # a (bf16-rounded) row of the fully-folded logits table (f32 accumulation).
    y = jnp.dot(tab_ref[...], onehot,
                preferred_element_type=jnp.float32)              # (2V, TM) f32

    # Zero out padded positions (2D padding mask); f32 epilogue (v5e-safe).
    y = y * (1.0 - mask_ref[...])

    noise_ref[...] = y[:v, :]
    mut_ref[...] = y[v:, :]


# ------------------------------- wrapper -------------------------------------


def msagen_forward(batched_data, params, *, tile_rows=8192):
    """Pure-JAX wrapper around the Pallas kernel.

    batched_data keys (mirroring the torch module):
      '128_msa_token_type' : int32 (B, D, L)  MSA token ids
      '128_2D_padding_mask': bool  (B, D, L)  True where padding
      'padding_mask'       : bool  (B, L)     sequence-level padding mask
    """
    tokens = batched_data["128_msa_token_type"]
    pad2d = batched_data["128_2D_padding_mask"]

    B, D, L = tokens.shape
    V, E = params["emb"].shape

    # ---- offline algebraic folding (tiny, wrapper-side, exact in f32) --------
    # Every op after the embedding lookup is per-row, so
    #   onehot @ (gelu(emb @ w1 + b1) @ [wn|wm] + [bn|bm])
    # equals the full per-token pipeline.
    h_table = jax.nn.gelu(params["emb"] @ params["w1"] + params["b1"],
                          approximate=False)                     # (V, H) f32
    logits_table = jnp.concatenate(
        [h_table @ params["wn"] + params["bn"],
         h_table @ params["wm"] + params["bm"]], axis=1)         # (V, 2V) f32
    # bf16 table: the one-hot matmul then returns the bf16-rounded row exactly.
    # TODO(synk): keep this table in f32 (single MXU f32 pass) if accuracy of
    # the downstream loss regresses with bf16 logits values.
    tab_t = logits_table.T.astype(jnp.bfloat16)                  # (2V, V) bf16

    # ---- lane-dense row tiling: rows live on the lane (last) axis ------------
    n_rows = B * D * L
    tile_rows = min(tile_rows, pl.cdiv(n_rows, 128) * 128)
    tile_rows = max(128, (tile_rows // 128) * 128)
    n_pad = pl.cdiv(n_rows, tile_rows) * tile_rows

    tok_flat = tokens.reshape(1, n_rows).astype(jnp.int32)
    mask_flat = pad2d.reshape(1, n_rows).astype(jnp.float32)
    if n_pad != n_rows:
        extra = n_pad - n_rows
        tok_flat = jnp.pad(tok_flat, ((0, 0), (0, extra)))
        # Padded columns use token 0 and mask 1.0 -> zeroed in the kernel.
        mask_flat = jnp.pad(mask_flat, ((0, 0), (0, extra)), constant_values=1.0)

    grid = (n_pad // tile_rows,)

    lane_spec = pl.BlockSpec((1, tile_rows), lambda i: (0, i))   # lane-dense input
    out_spec = pl.BlockSpec((V, tile_rows), lambda i: (0, i))    # lane-dense output
    tab_spec = pl.BlockSpec((2 * V, V), lambda i: (0, 0))        # constant table

    flops = 2 * n_pad * V * (2 * V)
    bytes_accessed = (tok_flat.size * 4 + mask_flat.size * 4 + tab_t.size * 2
                      + 2 * n_pad * V * 4)

    # Output dtype stays f32 for fidelity with the torch module; switching to
    # bf16 would halve writeback (dominant HBM term) if the loss tolerates it.
    noise_t, mut_t = pl.pallas_call(
        _msagen_kernel,
        out_shape=(jax.ShapeDtypeStruct((V, n_pad), jnp.float32),
                   jax.ShapeDtypeStruct((V, n_pad), jnp.float32)),
        grid_spec=pltpu.PrefetchScalarGridSpec(
            num_scalar_prefetch=0,
            grid=grid,
            in_specs=[lane_spec, lane_spec, tab_spec],
            out_specs=[out_spec, out_spec],
        ),
        compiler_params=pltpu.CompilerParams(
            dimension_semantics=("parallel",),      # rows shard over v7x 2 TCs
            vmem_limit_bytes=32 * 1024 * 1024),     # ~10 MiB used at TM=8192
        cost_estimate=pl.CostEstimate(
            flops=flops, transcendentals=0, bytes_accessed=bytes_accessed),
    )(tok_flat, mask_flat, tab_t)

    if n_pad != n_rows:
        noise_t = noise_t[:, :n_rows]
        mut_t = mut_t[:, :n_rows]

    # TODO(synk): a layout-aware consumer could take the (V, rows) layout
    # directly and skip these wrapper-side transposes.
    noise_pred = noise_t.T.reshape(B, D, L, V)
    mutation_pred = mut_t.T.reshape(B, D, L, V)

    return {
        "noise_pred": noise_pred,
        "mutation_pred": mutation_pred,
        "padding_mask": batched_data["padding_mask"],
    }


# ----------------------------- parameter init -------------------------------


def init_params(key, vocab, embed_dim, hidden_dim):
    ks = jax.random.split(key, 4)
    s = lambda k, shape, fan_in: (jax.random.normal(k, shape, jnp.float32)
                                  / jnp.sqrt(jnp.float32(fan_in)))
    return {
        "emb": s(ks[0], (vocab, embed_dim), vocab),
        "w1": s(ks[1], (embed_dim, hidden_dim), embed_dim),
        "b1": jnp.zeros((1, hidden_dim), jnp.float32),
        "wn": s(ks[2], (hidden_dim, vocab), hidden_dim),
        "bn": jnp.zeros((1, vocab), jnp.float32),
        "wm": s(ks[3], (hidden_dim, vocab), hidden_dim),
        "bm": jnp.zeros((1, vocab), jnp.float32),
    }


# ----------------------------------- main ------------------------------------

if __name__ == "__main__":
    # Small shapes consistent with the module's forward:
    #   B=2 batch, MSA depth D=4 (stands in for the 128-row MSA), L=16 residues,
    #   vocab V=32 MSA token types, embed E=32, hidden H=32.
    B, D, L = 2, 4, 16
    V, E, H = 32, 32, 32

    key = jax.random.PRNGKey(0)
    k_tok, k_pad, k_par = jax.random.split(key, 3)

    # Note: token ids are assumed in [0, V); out-of-range ids would select an
    # all-zero one-hot (bias-free zero row) instead of erroring like torch.
    tokens = jax.random.randint(k_tok, (B, D, L), 0, V, dtype=jnp.int32)
    pad2d = jax.random.bernoulli(k_pad, 0.1, (B, D, L))
    padding_mask = pad2d[:, 0, :]  # sequence-level mask passthrough (demo stand-in)

    batched_data = {
        "128_msa_token_type": tokens,
        "128_2D_padding_mask": pad2d,
        "padding_mask": padding_mask,
    }

    params = init_params(k_par, V, E, H)

    out = msagen_forward(batched_data, params)
    jax.block_until_ready(out)

    # Sanity: shapes and mask application.
    assert out["noise_pred"].shape == (B, D, L, V)
    assert out["mutation_pred"].shape == (B, D, L, V)
    masked = pad2d[..., None]
    assert bool(jnp.all(jnp.where(masked, out["noise_pred"], 0.0) == 0.0))
    assert bool(jnp.all(jnp.where(masked, out["mutation_pred"], 0.0) == 0.0))

    # Cross-check against a plain-JAX f32 reference of the same computation.
    # Kernel selects bf16-rounded rows of the folded f32 table, hence tolerance.
    emb_ref = params["emb"][tokens]                        # nn.Embedding
    h_ref = jax.nn.gelu(emb_ref @ params["w1"] + params["b1"][0], approximate=False)
    keep = 1.0 - pad2d[..., None].astype(jnp.float32)
    noise_ref = (h_ref @ params["wn"] + params["bn"][0]) * keep
    mut_ref = (h_ref @ params["wm"] + params["bm"][0]) * keep
    assert jnp.allclose(out["noise_pred"], noise_ref, atol=2e-2, rtol=2e-2)
    assert jnp.allclose(out["mutation_pred"], mut_ref, atol=2e-2, rtol=2e-2)

    print("KERNEL_OK")
</pallas_src>

<mosaic_0001>
module attributes {stable_mosaic.version = 11 : i64} {
  func.func @_msagen_kernel(%arg0: i32, %arg1: memref<1x128xi32, #tpu.memory_space<vmem>>, %arg2: memref<1x128xf32, #tpu.memory_space<vmem>>, %arg3: memref<64x32xbf16, #tpu.memory_space<vmem>>, %arg4: memref<32x128xf32, #tpu.memory_space<vmem>>, %arg5: memref<32x128xf32, #tpu.memory_space<vmem>>) attributes {dimension_semantics = [#tpu.dimension_semantics<parallel>], iteration_bounds = array<i64: 1>, scalar_prefetch = 0 : i64, scratch_operands = 0 : i64, tpu.core_type = #tpu.core_type<tc>, window_params = [{transform_indices = @transform_0, window_bounds = array<i64: 1, 128>}, {transform_indices = @transform_1, window_bounds = array<i64: 1, 128>}, {pipeline_mode = #tpu.pipeline_mode<synchronous>, transform_indices = @transform_2, window_bounds = array<i64: 64, 32>}, {transform_indices = @transform_3, window_bounds = array<i64: 32, 128>}, {transform_indices = @transform_4, window_bounds = array<i64: 32, 128>}]} {
    %c0 = arith.constant 0 : index
    %c0_0 = arith.constant 0 : index
    %0 = vector.load %arg1[%c0, %c0_0] : memref<1x128xi32, #tpu.memory_space<vmem>>, vector<1x128xi32>
    %1 = tpu.iota {dimensions = array<i32: 0>} : vector<32x128xi32>
    %2 = vector.broadcast %0 : vector<1x128xi32> to vector<32x128xi32>
    %3 = arith.cmpi eq, %1, %2 : vector<32x128xi32>
    %4 = arith.extui %3 : vector<32x128xi1> to vector<32x128xi32>
    %5 = arith.sitofp %4 : vector<32x128xi32> to vector<32x128xf32>
    %6 = arith.truncf %5 : vector<32x128xf32> to vector<32x128xbf16>
    %c0_1 = arith.constant 0 : index
    %c0_2 = arith.constant 0 : index
    %7 = vector.load %arg3[%c0_1, %c0_2] : memref<64x32xbf16, #tpu.memory_space<vmem>>, vector<64x32xbf16>
    %cst = arith.constant dense<0.000000e+00> : vector<64x128xf32>
    %8 = tpu.matmul %7, %6, %cst {dimension_numbers = #tpu.dot_dimension_numbers<[1], [0], [0], [1], [0, 0, 1, 1], [], []>} : vector<64x32xbf16>, vector<32x128xbf16>, vector<64x128xf32> -> vector<64x128xf32>
    %c0_3 = arith.constant 0 : index
    %c0_4 = arith.constant 0 : index
    %9 = vector.load %arg2[%c0_3, %c0_4] : memref<1x128xf32, #tpu.memory_space<vmem>>, vector<1x128xf32>
    %cst_5 = arith.constant 1.000000e+00 : f32
    %10 = vector.broadcast %cst_5 : f32 to vector<1x128xf32>
    %11 = arith.subf %10, %9 : vector<1x128xf32>
    %12 = vector.broadcast %11 : vector<1x128xf32> to vector<64x128xf32>
    %13 = arith.mulf %8, %12 : vector<64x128xf32>
    %14 = vector.extract_strided_slice %13 {offsets = [0, 0], sizes = [32, 128], strides = [1, 1]} : vector<64x128xf32> to vector<32x128xf32>
    %c0_6 = arith.constant 0 : index
    %c0_7 = arith.constant 0 : index
    %15 = vector.load %arg4[%c0_6, %c0_7] : memref<32x128xf32, #tpu.memory_space<vmem>>, vector<32x128xf32>
    tpu.vector_store %arg4[%c0_6, %c0_7], %14 {strides = array<i32>} : memref<32x128xf32, #tpu.memory_space<vmem>>, vector<32x128xf32>,
    %16 = vector.extract_strided_slice %13 {offsets = [32, 0], sizes = [32, 128], strides = [1, 1]} : vector<64x128xf32> to vector<32x128xf32>
    %c0_8 = arith.constant 0 : index
    %c0_9 = arith.constant 0 : index
    %17 = vector.load %arg5[%c0_8, %c0_9] : memref<32x128xf32, #tpu.memory_space<vmem>>, vector<32x128xf32>
    tpu.vector_store %arg5[%c0_8, %c0_9], %16 {strides = array<i32>} : memref<32x128xf32, #tpu.memory_space<vmem>>, vector<32x128xf32>,
    return
  }
  func.func @transform_0(%arg0: i32) -> (i32, i32) {
    %c0_i32 = arith.constant 0 : i32
    %c0_i32_0 = arith.constant 0 : i32
    return %c0_i32, %arg0 : i32, i32
  }
  func.func @transform_1(%arg0: i32) -> (i32, i32) {
    %c0_i32 = arith.constant 0 : i32
    %c0_i32_0 = arith.constant 0 : i32
    return %c0_i32, %arg0 : i32, i32
  }
  func.func @transform_2(%arg0: i32) -> (i32, i32) {
    %c0_i32 = arith.constant 0 : i32
    %c0_i32_0 = arith.constant 0 : i32
    %c0_i32_1 = arith.constant 0 : i32
    return %c0_i32, %c0_i32_0 : i32, i32
  }
  func.func @transform_3(%arg0: i32) -> (i32, i32) {
    %c0_i32 = arith.constant 0 : i32
    %c0_i32_0 = arith.constant 0 : i32
    return %c0_i32, %arg0 : i32, i32
  }
  func.func @transform_4(%arg0: i32) -> (i32, i32) {
    %c0_i32 = arith.constant 0 : i32
    %c0_i32_0 = arith.constant 0 : i32
    return %c0_i32, %arg0 : i32, i32
  }
}

</mosaic_0001>

<llo_original>
// kernel: tpu_custom_call.1
$region0: #{tpu_custom_call.1}
  #allocation0 [shape = 'u32[]', space=smem, size = 0x4, offset = 0x4, fixed_abs, tag = 'smem constant byte address 0x4 - core index']
  #allocation1 [shape = 'u32[144,128]{1,0:T(1,128)}', space=vmem, size = 0x12000, scoped, tag = 'internal scratch']
  %s0 = inlined_call_operand.vmem [shape: s32[1,128], index: 0, kind: input, shape index: {}]
  %s1 = inlined_call_operand.vmem [shape: f32[1,128], index: 1, kind: input, shape index: {}]
  %s2 = inlined_call_operand.vmem [shape: bf16[64,32], index: 2, kind: input, shape index: {}]
  %s3 = inlined_call_operand.hbm [shape: f32[32,128], index: 3, kind: output, shape index: {0}]
  %s4 = inlined_call_operand.hbm [shape: f32[32,128], index: 4, kind: output, shape index: {1}]
  %5 = xla_tuple %s3, %s4
  %s6 = sld [smem:[#allocation0]]
  $region30: #{tpu_custom_call.1} parent=0
    _
  %s8 = ssub.s32 1, %s6
  %s9 = scalar_select 0, %s8, %s6
  $region1: #{tpu_custom_call.1} parent=0
    #allocation2 [shape = 'u8[16384]{0}', space=vmem, size = 0x4000, scoped, tag = 'output window, operand 0, single buffered']
    #allocation3 [shape = 's32[1]{0}', space=sflag, size = 0x4, scoped, tag = 'scoped memory for tpu_custom_call.1']
    #allocation4 [shape = 'u8[16384]{0}', space=vmem, size = 0x4000, scoped, tag = 'output window, operand 1, single buffered']
    #allocation5 [shape = 's32[1]{0}', space=sflag, size = 0x4, scoped, tag = 'scoped memory for tpu_custom_call.1']
    %10 = vsyncpa [#allocation3], 0
    %11 = vsyncpa [#allocation5], 0
    // Predicated region
    $region2: #{tpu_custom_call.1} parent=1 // pred_check
      _
    $region3: #{tpu_custom_call.1} parent=1 // pred_check_branch
      %13 = sbr.rel (0) target = $region5
    $region4: #{tpu_custom_call.1} parent=1 // pred_region
      _
    $region5: #{tpu_custom_call.1} parent=1 // pred_fallthru
      _
    // Predicated region
    $region6: #{tpu_custom_call.1} parent=1 // pred_check
      _
    $region7: #{tpu_custom_call.1} parent=1 // pred_check_branch
      %15 = sbr.rel (0) target = $region9
    $region8: #{tpu_custom_call.1} parent=1 // pred_region
      _
    $region9: #{tpu_custom_call.1} parent=1 // pred_fallthru
      _
    // Predicated region
    $region10: #{tpu_custom_call.1} parent=1 // pred_check
      _
    $region11: #{tpu_custom_call.1} parent=1 // pred_check_branch
      %17 = sbr.rel (0) target = $region13
    $region12: #{tpu_custom_call.1} parent=1 // pred_region
      _
    $region13: #{tpu_custom_call.1} parent=1 // pred_fallthru
      _
    %v19 = vld [vmem:[%s0] sm:$0x1]
    %v20 = vlaneseq
    %v21 = vshrl.u32 %v20, 7
    %v22 = vadd.s32 %v21, 8
    %v23 = vadd.s32 %v21, 16
    %v24 = vadd.s32 %v21, 24
    %v25 = vlaneseq
    %v26 = vshrl.u32 %v25, 7
    %v27 = vsub.s32 0, %v26
    %v28 = vrot.slane %v19, %v27
    %vm29 = vcmp.eq.s32.totalorder %v21, %v28
    %vm30 = vcmp.eq.s32.totalorder %v22, %v28
    %vm31 = vcmp.eq.s32.totalorder %v23, %v28
    %vm32 = vcmp.eq.s32.totalorder %v24, %v28
    %v33 = vsel %vm29, 1, 0
    %v34 = vsel %vm30, 1, 0
    %v35 = vsel %vm31, 1, 0
    %v36 = vsel %vm32, 1, 0
    %v37 = vcvt.s32.f32 %v33
    %v38 = vcvt.s32.f32 %v34
    %v39 = vcvt.s32.f32 %v35
    %v40 = vcvt.s32.f32 %v36
    %v41 = vpack.c.bf16 %v38, %v37
    %v42 = vpack.c.bf16 %v40, %v39
    %v43 = vld [vmem:[%s2] sm:$0xf]
    %v44 = vld [vmem:[%s2 + $0x4] sm:$0xf]
    %v45 = vld [vmem:[%s2 + $0x8] sm:$0xf]
    %v46 = vld [vmem:[%s2 + $0xc] sm:$0xf]
    %v47 = vld [vmem:[%s2 + $0x10] sm:$0xf]
    %v48 = vld [vmem:[%s2 + $0x14] sm:$0xf]
    %v49 = vld [vmem:[%s2 + $0x18] sm:$0xf]
    %v50 = vld [vmem:[%s2 + $0x1c] sm:$0xf]
    %v59 = vunpack.c.l.b16 %v43
    %v60 = vunpack.c.l.b16 %v44
    %v61 = vunpack.c.l.b16 %v45
    %v62 = vunpack.c.l.b16 %v46
    %v63 = vunpack.c.l.b16 %v47
    %v64 = vunpack.c.l.b16 %v48
    %v65 = vunpack.c.l.b16 %v49
    %v66 = vunpack.c.l.b16 %v50
    %v67 = vpack.c.b16 %v60, %v59
    %v68 = vpack.c.b16 %v62, %v61
    %v69 = vpack.c.b16 %v64, %v63
    %v70 = vpack.c.b16 %v66, %v65
    %vm71 = vcmask 261120
    %v73 = vsel %vm71, %v67, 0
    %v76 = vsel %vm71, %v68, 0
    %v79 = vsel %vm71, %v69, 0
    %v82 = vsel %vm71, %v70, 0
    %84 = vmatprep.subr.bf16.mxu0 0
    %85 = vmatpush1.bf16.msra.mxu0 %v41
    %86 = vmatprep.subr.bf16.mxu0 0
    %87 = vmatpush1.bf16.msra.mxu0 %v42
    %88 = vmatprep.subr.bf16.mxu0 0
    %89 = vmatpush1.bf16.msra.mxu0 0
    %90 = vmatprep.subr.bf16.mxu0 0
    %91 = vmatpush1.bf16.msra.mxu0 0
    %92 = vmatprep.subr.bf16.mxu0 0
    %93 = vmatpush1.bf16.msra.mxu0 0
    %94 = vmatprep.subr.bf16.mxu0 0
    %95 = vmatpush1.bf16.msra.mxu0 0
    %96 = vmatprep.subr.bf16.mxu0 0
    %97 = vmatpush1.bf16.msra.mxu0 0
    %98 = vmatprep.subr.bf16.mxu0 0
    %99 = vmatpush1.bf16.msra.mxu0 0
    %100 = vmatprep.subr.bf16.mxu0 0
    %101 = vmatpush1.bf16.msra.mxu0 0
    %102 = vmatprep.subr.bf16.mxu0 0
    %103 = vmatpush1.bf16.msra.mxu0 0
    %104 = vmatprep.subr.bf16.mxu0 0
    %105 = vmatpush1.bf16.msra.mxu0 0
    %106 = vmatprep.subr.bf16.mxu0 0
    %107 = vmatpush1.bf16.msra.mxu0 0
    %108 = vmatprep.subr.bf16.mxu0 0
    %109 = vmatpush1.bf16.msra.mxu0 0
    %110 = vmatprep.subr.bf16.mxu0 0
    %111 = vmatpush1.bf16.msra.mxu0 0
    %112 = vmatprep.subr.bf16.mxu0 0
    %113 = vmatpush1.bf16.msra.mxu0 0
    %114 = vmatprep.subr.bf16.mxu0 0
    %115 = vmatpush1.bf16.msra.mxu0 0
    %116 = vmatprep.mubr.bf16.mxu0 0
    %117 = vmatmul.mubr.bf16.gmra.mrb[0].mxu0 %v73
    %v118 = vpop.f32.mrb[0].mxu0
    %v119 = vadd.f32 0.0, %v118
    %v120 = vpop.f32.mrb[0].mxu0
    %v121 = vpop.f32.mrb[0].mxu0
    %v122 = vadd.f32 0.0, %v121
    %v123 = vpop.f32.mrb[0].mxu0
    %124 = vmatprep.mubr.bf16.mxu0 0
    %125 = vmatmul.mubr.bf16.gmra.mrb[0].mxu0 %v76
    %v126 = vpop.f32.mrb[0].mxu0
    %v127 = vadd.f32 0.0, %v126
    %v128 = vpop.f32.mrb[0].mxu0
    %v129 = vpop.f32.mrb[0].mxu0
    %v130 = vadd.f32 0.0, %v129
    %v131 = vpop.f32.mrb[0].mxu0
    %132 = vmatprep.mubr.bf16.mxu0 0
    %133 = vmatmul.mubr.bf16.gmra.mrb[0].mxu0 %v79
    %v134 = vpop.f32.mrb[0].mxu0
    %v135 = vadd.f32 0.0, %v134
    %v136 = vpop.f32.mrb[0].mxu0
    %v137 = vpop.f32.mrb[0].mxu0
    %v138 = vadd.f32 0.0, %v137
    %v139 = vpop.f32.mrb[0].mxu0
    %140 = vmatprep.mubr.bf16.mxu0 0
    %141 = vmatmul.mubr.bf16.gmra.mrb[0].mxu0 %v82
    %v142 = vpop.f32.mrb[0].mxu0
    %v143 = vadd.f32 0.0, %v142
    %v144 = vpop.f32.mrb[0].mxu0
    %v145 = vpop.f32.mrb[0].mxu0
    %v146 = vadd.f32 0.0, %v145
    %v147 = vpop.f32.mrb[0].mxu0
    %148 = vdwg.mxu0
    %v149 = vld [vmem:[%s1] sm:$0x1]
    %v150 = vsub.f32 1.0, %v149
    %v152 = vlaneseq
    %v153 = vshrl.u32 %v152, 7
    %v154 = vsub.s32 0, %v153
    %v155 = vrot.slane %v150, %v154
    %v157 = vmul.f32 %v119, %v155
    %v158 = vmul.f32 %v122, %v155
    %v159 = vmul.f32 %v127, %v155
    %v160 = vmul.f32 %v130, %v155
    %v161 = vmul.f32 %v135, %v155
    %v162 = vmul.f32 %v138, %v155
    %v163 = vmul.f32 %v143, %v155
    %v164 = vmul.f32 %v146, %v155
    %165 = vst [vmem:[#allocation2] sm:$0xff] %v157
    %166 = vst [vmem:[#allocation2 + $0x8] sm:$0xff] %v158
    %167 = vst [vmem:[#allocation2 + $0x10] sm:$0xff] %v159
    %168 = vst [vmem:[#allocation2 + $0x18] sm:$0xff] %v160
    %169 = vst [vmem:[#allocation4] sm:$0xff] %v161
    %170 = vst [vmem:[#allocation4 + $0x8] sm:$0xff] %v162
    %171 = vst [vmem:[#allocation4 + $0x10] sm:$0xff] %v163
    %172 = vst [vmem:[#allocation4 + $0x18] sm:$0xff] %v164
    // Predicated region
    $region14: #{tpu_custom_call.1} parent=1 // pred_check
      _
    $region15: #{tpu_custom_call.1} parent=1 // pred_check_branch
      %174 = sbr.rel (0) target = $region17
    $region16: #{tpu_custom_call.1} parent=1 // pred_region
      %s176 = ssub.s32 512, 512
      %177 = vsyncadd [#allocation3], %s176
      %s178 = sshll.u32 [#allocation2], 4
      %s179 = int_to_ptr.vmem [resolvable:$true] %s178
      %184 = dma.vmem_to_hbm [thread:$0]  %s179, 512, %s3, [#allocation3], 128, 128, 8
    $region17: #{tpu_custom_call.1} parent=1 // pred_fallthru
      _
    // Predicated region
    $region18: #{tpu_custom_call.1} parent=1 // pred_check
      _
    $region19: #{tpu_custom_call.1} parent=1 // pred_check_branch
      %186 = sbr.rel (0) target = $region21
    $region20: #{tpu_custom_call.1} parent=1 // pred_region
      %s188 = ssub.s32 512, 512
      %189 = vsyncadd [#allocation5], %s188
      %s190 = sshll.u32 [#allocation4], 4
      %s191 = int_to_ptr.vmem [resolvable:$true] %s190
      %196 = dma.vmem_to_hbm [thread:$0]  %s191, 512, %s4, [#allocation5], 128, 128, 8
    $region21: #{tpu_custom_call.1} parent=1 // pred_fallthru
      _
    // Predicated region
    $region22: #{tpu_custom_call.1} parent=1 // pred_check
      _
    $region23: #{tpu_custom_call.1} parent=1 // pred_check_branch
      %198 = sbr.rel (0) target = $region25
    $region24: #{tpu_custom_call.1} parent=1 // pred_region
      %199 = dma.done [#allocation3], 512
    $region25: #{tpu_custom_call.1} parent=1 // pred_fallthru
      _
    // Predicated region
    $region26: #{tpu_custom_call.1} parent=1 // pred_check
      _
    $region27: #{tpu_custom_call.1} parent=1 // pred_check_branch
      %201 = sbr.rel (0) target = $region29
    $region28: #{tpu_custom_call.1} parent=1 // pred_region
      %202 = dma.done [#allocation5], 512
    $region29: #{tpu_custom_call.1} parent=1 // pred_fallthru
      _
    %203 = vsyncpa [#allocation3], 1
    %204 = vsyncpa [#allocation5], 1

</llo_original>
